<compile_context>
chip_gen: v5e
topology: v5e:2x2
jax: 0.10.0
libtpu: 0.0.40
codegen_flags: <defaults>
</compile_context>

<pallas_src>
import functools

import jax
import jax.numpy as jnp
import numpy as np
from jax.experimental import pallas as pl
from jax.experimental.pallas import tpu as pltpu


# ---------------------------------------------------------------------------
# MixConv channel splitting (identical to the PyTorch static method)
# ---------------------------------------------------------------------------
def split_channels(channels, kernel_count):
    sc = [channels // kernel_count] * kernel_count
    sc[0] += channels - sum(sc)
    return sc


def _round_up(x, m):
    return ((x + m - 1) // m) * m


# ---------------------------------------------------------------------------
# Pallas kernel: one lane-dense GEMM (BN already folded into the weights)
#   w_ref : (Cout_pad, K_pad)   compute dtype (f32 or bf16)
#   p_ref : (K_pad, tile_p)     compute dtype
#   o_ref : (Cout_pad, tile_p)  f32 output tile (last dim multiple of 128)
# ---------------------------------------------------------------------------
def _mixconv_bn_relu_kernel(w_ref, p_ref, o_ref):
    acc = jnp.dot(w_ref[...], p_ref[...], preferred_element_type=jnp.float32)
    o_ref[...] = jnp.maximum(acc, 0.0).astype(o_ref.dtype)  # ReLU epilogue in f32


def _fused_mixconv_gemm(w_big, patches_t, tile_p, vmem_limit):
    cout_pad, k_pad = w_big.shape
    _, p_pad = patches_t.shape
    grid = (p_pad // tile_p,)
    return pl.pallas_call(
        _mixconv_bn_relu_kernel,
        out_shape=jax.ShapeDtypeStruct((cout_pad, p_pad), jnp.float32),
        grid_spec=pltpu.PrefetchScalarGridSpec(
            num_scalar_prefetch=0,
            grid=grid,
            in_specs=[
                # Block-diagonal weight: constant across the grid.
                # (pipeline_mode=pl.Buffered(1) could reclaim its 2nd buffer on
                #  v7x for very large weights; unnecessary at these sizes.)
                pl.BlockSpec((cout_pad, k_pad), lambda i: (0, 0)),
                # Patch columns: lane-dense tile of P per grid step.
                pl.BlockSpec((k_pad, tile_p), lambda i: (0, i)),
            ],
            out_specs=pl.BlockSpec((cout_pad, tile_p), lambda i: (0, i)),
        ),
        compiler_params=pltpu.CompilerParams(
            dimension_semantics=("parallel",),
            vmem_limit_bytes=vmem_limit,
        ),
    )(w_big, patches_t)


# ---------------------------------------------------------------------------
# Glue: im2col producing a (K, P) patch matrix (K-major, P on the lane axis)
# K index = (dy*kw + dx)*Cin + cin ; P index = ((n*H_out)+oy)*W_out + ox
# ---------------------------------------------------------------------------
def _im2col_t(x_nhwc, kh, kw, pad, stride=1):
    N, H, W, C = x_nhwc.shape
    xp = jnp.pad(x_nhwc, ((0, 0), (pad, pad), (pad, pad), (0, 0)))
    H_out = (H + 2 * pad - kh) // stride + 1
    W_out = (W + 2 * pad - kw) // stride + 1
    cols = []
    for dy in range(kh):
        for dx in range(kw):
            cols.append(xp[:, dy:dy + stride * H_out:stride,
                            dx:dx + stride * W_out:stride, :])
    p = jnp.stack(cols, axis=0)          # (kh*kw, N, H_out, W_out, C)
    p = jnp.moveaxis(p, -1, 1)           # (kh*kw, C, N, H_out, W_out)
    return p.reshape(kh * kw * C, N * H_out * W_out), (N, H_out, W_out)


def _choose_tile_p(P, k_pad, cout_pad, itemsize, max_tile_p,
                   vmem_budget=24 * 1024 * 1024):
    """Largest lane-dense (multiple-of-128) P tile that fits the VMEM budget."""
    max_tile_p = max(128, (max_tile_p // 128) * 128)
    # per-P-column footprint: double-buffered patch column + f32 output column
    per_col = 2 * (k_pad * itemsize + cout_pad * 4)
    cap_vmem = max(128, (vmem_budget // per_col) // 128 * 128)
    t = min(max_tile_p, cap_vmem, _round_up(P, 128))
    return max(int(t), 128)


# ---------------------------------------------------------------------------
# MixConvBlock forward (inference-mode BatchNorm folded into the weights)
# ---------------------------------------------------------------------------
@functools.partial(
    jax.jit,
    static_argnames=("kernel_sizes", "paddings", "stride", "bn_eps",
                     "compute_dtype", "max_tile_p"))
def mixconv_block_forward(x_nchw, params, *, kernel_sizes, paddings, stride=1,
                          bn_eps=1e-5, compute_dtype=jnp.bfloat16,
                          max_tile_p=512):
    N, in_channels, H, W = x_nchw.shape
    n_splits = len(kernel_sizes)
    in_splits = split_channels(in_channels, n_splits)
    cout_splits = [int(w.shape[0]) for w in params["conv_weights"]]
    cout_total = sum(cout_splits)

    # BatchNorm (eval): y = gamma*(x-mean)/sqrt(var+eps) + beta  ->  scale/shift
    gamma, beta, r_mean, r_var = (params["bn_gamma"], params["bn_beta"],
                                  params["bn_mean"], params["bn_var"])
    scale_all = gamma / jnp.sqrt(r_var + bn_eps)
    shift_all = beta - r_mean * scale_all

    x_nhwc = jnp.transpose(x_nchw, (0, 2, 3, 1))  # NHWC for patch extraction

    # ---- per-split im2col, stacked along K (block-diagonal GEMM layout) ----
    patch_blocks, k_sizes = [], []
    c_in_off = 0
    out_hw = None
    for i, (k, pad) in enumerate(zip(kernel_sizes, paddings)):
        cin_i = in_splits[i]
        x_i = x_nhwc[..., c_in_off:c_in_off + cin_i]
        pt_i, hw_i = _im2col_t(x_i, k, k, pad, stride)
        if out_hw is None:
            out_hw = hw_i
        else:
            assert hw_i == out_hw, "MixConv splits must share output spatial dims"
        patch_blocks.append(pt_i)
        k_sizes.append(int(pt_i.shape[0]))
        c_in_off += cin_i

    N_, H_out, W_out = out_hw
    P = N_ * H_out * W_out
    K_total = sum(k_sizes)
    K_pad = _round_up(K_total + 1, 128)      # +1 row hosts the BN-shift bias
    Cout_pad = _round_up(cout_total, 16)     # clean sublane layout for f32/bf16

    itemsize = jnp.dtype(compute_dtype).itemsize
    tile_p = _choose_tile_p(P, K_pad, Cout_pad, itemsize, max_tile_p)
    P_pad = _round_up(P, tile_p)

    # Patch matrix (K_pad, P_pad): split blocks stacked on K, bias row of ones,
    # zeros elsewhere. Padded P columns produce garbage rows we slice off.
    patches_t = jnp.concatenate(
        patch_blocks + [jnp.ones((1, P), jnp.float32)], axis=0)
    patches_t = jnp.pad(
        patches_t, ((0, K_pad - (K_total + 1)), (0, P_pad - P)))
    patches_t = patches_t.astype(compute_dtype)

    # Block-diagonal weight (Cout_pad, K_pad) with BN scale folded into the
    # rows and BN shift as the bias column (index K_total).
    w_big = jnp.zeros((Cout_pad, K_pad), jnp.float32)
    k_off, co_off = 0, 0
    for i, (k, w) in enumerate(zip(kernel_sizes, params["conv_weights"])):
        cout_i, cin_i = int(w.shape[0]), int(w.shape[1])
        # (Cout_i, Cin_i, kh, kw) -> (Cout_i, kh, kw, Cin_i) -> (Cout_i, K_i)
        w_mat = jnp.transpose(w, (0, 2, 3, 1)).reshape(cout_i, k * k * cin_i)
        w_mat = w_mat * scale_all[co_off:co_off + cout_i][:, None]
        w_big = w_big.at[co_off:co_off + cout_i,
                         k_off:k_off + k_sizes[i]].set(w_mat)
        k_off += k_sizes[i]
        co_off += cout_i
    w_big = w_big.at[:cout_total, K_total].set(shift_all)  # folded BN shift
    w_big = w_big.astype(compute_dtype)

    # Explicit VMEM budget (v7x has only 64 MiB physical / 32 MiB default):
    # double-buffered patch tile + weight + f32 output tile, with headroom.
    need = (2 * K_pad * tile_p * itemsize
            + 2 * Cout_pad * K_pad * itemsize
            + 2 * Cout_pad * tile_p * 4)
    vmem_limit = int(min(max(2 * need, 8 * 1024 * 1024), 48 * 1024 * 1024))

    y = _fused_mixconv_gemm(w_big, patches_t, tile_p, vmem_limit)
    y = y[:cout_total, :P].reshape(cout_total, N_, H_out, W_out)
    return jnp.transpose(y, (1, 0, 2, 3))    # back to NCHW


# ---------------------------------------------------------------------------
# Pure-JAX reference (lax.conv) for the correctness check
# ---------------------------------------------------------------------------
def reference_forward(x_nchw, params, kernel_sizes, paddings, stride=1,
                      bn_eps=1e-5):
    in_channels = x_nchw.shape[1]
    in_splits = split_channels(in_channels, len(kernel_sizes))
    outs, off = [], 0
    for i, (k, pad) in enumerate(zip(kernel_sizes, paddings)):
        cin_i = in_splits[i]
        x_i = x_nchw[:, off:off + cin_i]
        w = params["conv_weights"][i]
        y = jax.lax.conv_general_dilated(
            x_i, w, window_strides=(stride, stride),
            padding=[(pad, pad), (pad, pad)],
            dimension_numbers=("NCHW", "OIHW", "NCHW"))
        outs.append(y)
        off += cin_i
    y = jnp.concatenate(outs, axis=1)
    gamma, beta, mean, var = (params["bn_gamma"], params["bn_beta"],
                              params["bn_mean"], params["bn_var"])
    scale = (gamma / jnp.sqrt(var + bn_eps))[None, :, None, None]
    shift = (beta - mean * gamma / jnp.sqrt(var + bn_eps))[None, :, None, None]
    return jnp.maximum(y * scale + shift, 0.0)


if __name__ == "__main__":
    # Module config: MixConvBlock(in=8, out=8, kernel_size=[3,5], stride=1,
    #                             padding=[1,2], groups=1, bias=False,
    #                             use_bn=True, activation=ReLU)
    in_channels, out_channels = 8, 8
    kernel_sizes = (3, 5)
    paddings = (1, 2)
    stride = 1
    N, H, W = 2, 16, 16

    key = jax.random.PRNGKey(0)
    k_x, k_w0, k_w1, k_g, k_b, k_m, k_v = jax.random.split(key, 7)

    in_splits = split_channels(in_channels, len(kernel_sizes))
    out_splits = split_channels(out_channels, len(kernel_sizes))

    conv_weights = [
        0.1 * jax.random.normal(
            k_w0, (out_splits[0], in_splits[0], kernel_sizes[0], kernel_sizes[0]),
            dtype=jnp.float32),
        0.1 * jax.random.normal(
            k_w1, (out_splits[1], in_splits[1], kernel_sizes[1], kernel_sizes[1]),
            dtype=jnp.float32),
    ]
    params = dict(
        conv_weights=conv_weights,
        bn_gamma=1.0 + 0.1 * jax.random.normal(k_g, (out_channels,), jnp.float32),
        bn_beta=0.1 * jax.random.normal(k_b, (out_channels,), jnp.float32),
        bn_mean=0.1 * jax.random.normal(k_m, (out_channels,), jnp.float32),
        bn_var=1.0 + 0.1 * jax.random.uniform(k_v, (out_channels,), jnp.float32),
    )

    x = jax.random.normal(k_x, (N, in_channels, H, W), dtype=jnp.float32)

    ref = reference_forward(x, params, kernel_sizes, paddings, stride)

    # Strict check on the f32 compute path (validates fused block-diagonal
    # GEMM, im2col column order and BN folding exactly).
    out_f32 = jax.block_until_ready(
        mixconv_block_forward(x, params, kernel_sizes=kernel_sizes,
                              paddings=paddings, stride=stride,
                              compute_dtype=jnp.float32))
    np.testing.assert_allclose(np.asarray(out_f32), np.asarray(ref),
                               rtol=1e-4, atol=1e-4)

    # Default perf path: bf16 operands (MXU-native on v5e/v6e/v7x), f32
    # accumulation and f32 epilogue; looser tolerance for bf16 rounding.
    out_bf16 = jax.block_until_ready(
        mixconv_block_forward(x, params, kernel_sizes=kernel_sizes,
                              paddings=paddings, stride=stride,
                              compute_dtype=jnp.bfloat16))
    np.testing.assert_allclose(np.asarray(out_bf16), np.asarray(ref),
                               rtol=3e-2, atol=3e-2)

    print("KERNEL_OK")
</pallas_src>

<mosaic_0001>
module attributes {stable_mosaic.version = 11 : i64} {
  func.func @_mixconv_bn_relu_kernel(%arg0: i32, %arg1: memref<16x256xf32, #tpu.memory_space<vmem>>, %arg2: memref<256x512xf32, #tpu.memory_space<vmem>>, %arg3: memref<16x512xf32, #tpu.memory_space<vmem>>) attributes {dimension_semantics = [#tpu.dimension_semantics<parallel>], iteration_bounds = array<i64: 1>, scalar_prefetch = 0 : i64, scratch_operands = 0 : i64, tpu.core_type = #tpu.core_type<tc>, window_params = [{pipeline_mode = #tpu.pipeline_mode<synchronous>, transform_indices = @transform_0, window_bounds = array<i64: 16, 256>}, {transform_indices = @transform_1, window_bounds = array<i64: 256, 512>}, {transform_indices = @transform_2, window_bounds = array<i64: 16, 512>}]} {
    %c0 = arith.constant 0 : index
    %c0_0 = arith.constant 0 : index
    %0 = vector.load %arg1[%c0, %c0_0] : memref<16x256xf32, #tpu.memory_space<vmem>>, vector<16x256xf32>
    %c0_1 = arith.constant 0 : index
    %c0_2 = arith.constant 0 : index
    %1 = vector.load %arg2[%c0_1, %c0_2] : memref<256x512xf32, #tpu.memory_space<vmem>>, vector<256x512xf32>
    %cst = arith.constant dense<0.000000e+00> : vector<16x512xf32>
    %2 = tpu.matmul %0, %1, %cst {dimension_numbers = #tpu.dot_dimension_numbers<[1], [0], [0], [1], [0, 0, 1, 1], [], []>} : vector<16x256xf32>, vector<256x512xf32>, vector<16x512xf32> -> vector<16x512xf32>
    %cst_3 = arith.constant 0.000000e+00 : f32
    %3 = vector.broadcast %cst_3 : f32 to vector<16x512xf32>
    %4 = arith.maximumf %2, %3 : vector<16x512xf32>
    %c0_4 = arith.constant 0 : index
    %c0_5 = arith.constant 0 : index
    %5 = vector.load %arg3[%c0_4, %c0_5] : memref<16x512xf32, #tpu.memory_space<vmem>>, vector<16x512xf32>
    tpu.vector_store %arg3[%c0_4, %c0_5], %4 {strides = array<i32>} : memref<16x512xf32, #tpu.memory_space<vmem>>, vector<16x512xf32>,
    return
  }
  func.func @transform_0(%arg0: i32) -> (i32, i32) {
    %c0_i32 = arith.constant 0 : i32
    %c0_i32_0 = arith.constant 0 : i32
    %c0_i32_1 = arith.constant 0 : i32
    return %c0_i32, %c0_i32_0 : i32, i32
  }
  func.func @transform_1(%arg0: i32) -> (i32, i32) {
    %c0_i32 = arith.constant 0 : i32
    %c0_i32_0 = arith.constant 0 : i32
    return %c0_i32, %arg0 : i32, i32
  }
  func.func @transform_2(%arg0: i32) -> (i32, i32) {
    %c0_i32 = arith.constant 0 : i32
    %c0_i32_0 = arith.constant 0 : i32
    return %c0_i32, %arg0 : i32, i32
  }
}

</mosaic_0001>

<llo_original>
// kernel: mixconv_block_forward.1
$region0: #{mixconv_block_forward.1}
  #allocation0 [shape = 'u32[]', space=smem, size = 0x4, offset = 0x4, fixed_abs, tag = 'smem constant byte address 0x4 - core index']
  #allocation1 [shape = 'u32[72,128]{1,0:T(1,128)}', space=vmem, size = 0x9000, scoped, tag = 'internal scratch']
  %s0 = inlined_call_operand.vmem [shape: f32[16,256], index: 0, kind: input, shape index: {}]
  %s1 = inlined_call_operand.vmem [shape: f32[256,512], index: 1, kind: input, shape index: {}]
  %s2 = inlined_call_operand.vmem [shape: f32[16,512], index: 2, kind: output, shape index: {}]
  %s3 = sld [smem:[#allocation0]]
  $region18: #{mixconv_block_forward.1} parent=0
    _
  %s5 = ssub.s32 1, %s3
  %s6 = scalar_select 0, %s5, %s3
  // Predicated region
  $region2: #{mixconv_block_forward.1} parent=0 // pred_check
    _
  $region3: #{mixconv_block_forward.1} parent=0 // pred_check_branch
    %8 = sbr.rel (0) target = $region5
  $region4: #{mixconv_block_forward.1} parent=0 // pred_region
    _
  $region5: #{mixconv_block_forward.1} parent=0 // pred_fallthru
    _
  // Predicated region
  $region6: #{mixconv_block_forward.1} parent=0 // pred_check
    _
  $region7: #{mixconv_block_forward.1} parent=0 // pred_check_branch
    %10 = sbr.rel (0) target = $region9
  $region8: #{mixconv_block_forward.1} parent=0 // pred_region
    _
  $region9: #{mixconv_block_forward.1} parent=0 // pred_fallthru
    _
  %v11 = vld [vmem:[%s0] sm:$0xff]
  %v12 = vld [vmem:[%s0 + $0x8] sm:$0xff]
  %v13 = vld [vmem:[%s0 + $0x10] sm:$0xff]
  %v14 = vld [vmem:[%s0 + $0x18] sm:$0xff]
  %v15 = vld [vmem:[%s1] sm:$0xff]
  %v16 = vld [vmem:[%s1 + $0x8] sm:$0xff]
  %v17 = vld [vmem:[%s1 + $0x10] sm:$0xff]
  %v18 = vld [vmem:[%s1 + $0x18] sm:$0xff]
  %v19 = vld [vmem:[%s1 + $0x20] sm:$0xff]
  %v20 = vld [vmem:[%s1 + $0x28] sm:$0xff]
  %v21 = vld [vmem:[%s1 + $0x30] sm:$0xff]
  %v22 = vld [vmem:[%s1 + $0x38] sm:$0xff]
  %v23 = vld [vmem:[%s1 + $0x40] sm:$0xff]
  %v24 = vld [vmem:[%s1 + $0x48] sm:$0xff]
  %v25 = vld [vmem:[%s1 + $0x50] sm:$0xff]
  %v26 = vld [vmem:[%s1 + $0x58] sm:$0xff]
  %v27 = vld [vmem:[%s1 + $0x60] sm:$0xff]
  %v28 = vld [vmem:[%s1 + $0x68] sm:$0xff]
  %v29 = vld [vmem:[%s1 + $0x70] sm:$0xff]
  %v30 = vld [vmem:[%s1 + $0x78] sm:$0xff]
  %v31 = vld [vmem:[%s1 + $0x80] sm:$0xff]
  %v32 = vld [vmem:[%s1 + $0x88] sm:$0xff]
  %v33 = vld [vmem:[%s1 + $0x90] sm:$0xff]
  %v34 = vld [vmem:[%s1 + $0x98] sm:$0xff]
  %v35 = vld [vmem:[%s1 + $0xa0] sm:$0xff]
  %v36 = vld [vmem:[%s1 + $0xa8] sm:$0xff]
  %v37 = vld [vmem:[%s1 + $0xb0] sm:$0xff]
  %v38 = vld [vmem:[%s1 + $0xb8] sm:$0xff]
  %v39 = vld [vmem:[%s1 + $0xc0] sm:$0xff]
  %v40 = vld [vmem:[%s1 + $0xc8] sm:$0xff]
  %v41 = vld [vmem:[%s1 + $0xd0] sm:$0xff]
  %v42 = vld [vmem:[%s1 + $0xd8] sm:$0xff]
  %v43 = vld [vmem:[%s1 + $0xe0] sm:$0xff]
  %v44 = vld [vmem:[%s1 + $0xe8] sm:$0xff]
  %v45 = vld [vmem:[%s1 + $0xf0] sm:$0xff]
  %v46 = vld [vmem:[%s1 + $0xf8] sm:$0xff]
  %v47 = vld [vmem:[%s1 + $0x100] sm:$0xff]
  %v48 = vld [vmem:[%s1 + $0x108] sm:$0xff]
  %v49 = vld [vmem:[%s1 + $0x110] sm:$0xff]
  %v50 = vld [vmem:[%s1 + $0x118] sm:$0xff]
  %v51 = vld [vmem:[%s1 + $0x120] sm:$0xff]
  %v52 = vld [vmem:[%s1 + $0x128] sm:$0xff]
  %v53 = vld [vmem:[%s1 + $0x130] sm:$0xff]
  %v54 = vld [vmem:[%s1 + $0x138] sm:$0xff]
  %v55 = vld [vmem:[%s1 + $0x140] sm:$0xff]
  %v56 = vld [vmem:[%s1 + $0x148] sm:$0xff]
  %v57 = vld [vmem:[%s1 + $0x150] sm:$0xff]
  %v58 = vld [vmem:[%s1 + $0x158] sm:$0xff]
  %v59 = vld [vmem:[%s1 + $0x160] sm:$0xff]
  %v60 = vld [vmem:[%s1 + $0x168] sm:$0xff]
  %v61 = vld [vmem:[%s1 + $0x170] sm:$0xff]
  %v62 = vld [vmem:[%s1 + $0x178] sm:$0xff]
  %v63 = vld [vmem:[%s1 + $0x180] sm:$0xff]
  %v64 = vld [vmem:[%s1 + $0x188] sm:$0xff]
  %v65 = vld [vmem:[%s1 + $0x190] sm:$0xff]
  %v66 = vld [vmem:[%s1 + $0x198] sm:$0xff]
  %v67 = vld [vmem:[%s1 + $0x1a0] sm:$0xff]
  %v68 = vld [vmem:[%s1 + $0x1a8] sm:$0xff]
  %v69 = vld [vmem:[%s1 + $0x1b0] sm:$0xff]
  %v70 = vld [vmem:[%s1 + $0x1b8] sm:$0xff]
  %v71 = vld [vmem:[%s1 + $0x1c0] sm:$0xff]
  %v72 = vld [vmem:[%s1 + $0x1c8] sm:$0xff]
  %v73 = vld [vmem:[%s1 + $0x1d0] sm:$0xff]
  %v74 = vld [vmem:[%s1 + $0x1d8] sm:$0xff]
  %v75 = vld [vmem:[%s1 + $0x1e0] sm:$0xff]
  %v76 = vld [vmem:[%s1 + $0x1e8] sm:$0xff]
  %v77 = vld [vmem:[%s1 + $0x1f0] sm:$0xff]
  %v78 = vld [vmem:[%s1 + $0x1f8] sm:$0xff]
  %v79 = vld [vmem:[%s1 + $0x200] sm:$0xff]
  %v80 = vld [vmem:[%s1 + $0x208] sm:$0xff]
  %v81 = vld [vmem:[%s1 + $0x210] sm:$0xff]
  %v82 = vld [vmem:[%s1 + $0x218] sm:$0xff]
  %v83 = vld [vmem:[%s1 + $0x220] sm:$0xff]
  %v84 = vld [vmem:[%s1 + $0x228] sm:$0xff]
  %v85 = vld [vmem:[%s1 + $0x230] sm:$0xff]
  %v86 = vld [vmem:[%s1 + $0x238] sm:$0xff]
  %v87 = vld [vmem:[%s1 + $0x240] sm:$0xff]
  %v88 = vld [vmem:[%s1 + $0x248] sm:$0xff]
  %v89 = vld [vmem:[%s1 + $0x250] sm:$0xff]
  %v90 = vld [vmem:[%s1 + $0x258] sm:$0xff]
  %v91 = vld [vmem:[%s1 + $0x260] sm:$0xff]
  %v92 = vld [vmem:[%s1 + $0x268] sm:$0xff]
  %v93 = vld [vmem:[%s1 + $0x270] sm:$0xff]
  %v94 = vld [vmem:[%s1 + $0x278] sm:$0xff]
  %v95 = vld [vmem:[%s1 + $0x280] sm:$0xff]
  %v96 = vld [vmem:[%s1 + $0x288] sm:$0xff]
  %v97 = vld [vmem:[%s1 + $0x290] sm:$0xff]
  %v98 = vld [vmem:[%s1 + $0x298] sm:$0xff]
  %v99 = vld [vmem:[%s1 + $0x2a0] sm:$0xff]
  %v100 = vld [vmem:[%s1 + $0x2a8] sm:$0xff]
  %v101 = vld [vmem:[%s1 + $0x2b0] sm:$0xff]
  %v102 = vld [vmem:[%s1 + $0x2b8] sm:$0xff]
  %v103 = vld [vmem:[%s1 + $0x2c0] sm:$0xff]
  %v104 = vld [vmem:[%s1 + $0x2c8] sm:$0xff]
  %v105 = vld [vmem:[%s1 + $0x2d0] sm:$0xff]
  %v106 = vld [vmem:[%s1 + $0x2d8] sm:$0xff]
  %v107 = vld [vmem:[%s1 + $0x2e0] sm:$0xff]
  %v108 = vld [vmem:[%s1 + $0x2e8] sm:$0xff]
  %v109 = vld [vmem:[%s1 + $0x2f0] sm:$0xff]
  %v110 = vld [vmem:[%s1 + $0x2f8] sm:$0xff]
  %v111 = vld [vmem:[%s1 + $0x300] sm:$0xff]
  %v112 = vld [vmem:[%s1 + $0x308] sm:$0xff]
  %v113 = vld [vmem:[%s1 + $0x310] sm:$0xff]
  %v114 = vld [vmem:[%s1 + $0x318] sm:$0xff]
  %v115 = vld [vmem:[%s1 + $0x320] sm:$0xff]
  %v116 = vld [vmem:[%s1 + $0x328] sm:$0xff]
  %v117 = vld [vmem:[%s1 + $0x330] sm:$0xff]
  %v118 = vld [vmem:[%s1 + $0x338] sm:$0xff]
  %v119 = vld [vmem:[%s1 + $0x340] sm:$0xff]
  %v120 = vld [vmem:[%s1 + $0x348] sm:$0xff]
  %v121 = vld [vmem:[%s1 + $0x350] sm:$0xff]
  %v122 = vld [vmem:[%s1 + $0x358] sm:$0xff]
  %v123 = vld [vmem:[%s1 + $0x360] sm:$0xff]
  %v124 = vld [vmem:[%s1 + $0x368] sm:$0xff]
  %v125 = vld [vmem:[%s1 + $0x370] sm:$0xff]
  %v126 = vld [vmem:[%s1 + $0x378] sm:$0xff]
  %v127 = vld [vmem:[%s1 + $0x380] sm:$0xff]
  %v128 = vld [vmem:[%s1 + $0x388] sm:$0xff]
  %v129 = vld [vmem:[%s1 + $0x390] sm:$0xff]
  %v130 = vld [vmem:[%s1 + $0x398] sm:$0xff]
  %v131 = vld [vmem:[%s1 + $0x3a0] sm:$0xff]
  %v132 = vld [vmem:[%s1 + $0x3a8] sm:$0xff]
  %v133 = vld [vmem:[%s1 + $0x3b0] sm:$0xff]
  %v134 = vld [vmem:[%s1 + $0x3b8] sm:$0xff]
  %v135 = vld [vmem:[%s1 + $0x3c0] sm:$0xff]
  %v136 = vld [vmem:[%s1 + $0x3c8] sm:$0xff]
  %v137 = vld [vmem:[%s1 + $0x3d0] sm:$0xff]
  %v138 = vld [vmem:[%s1 + $0x3d8] sm:$0xff]
  %v139 = vld [vmem:[%s1 + $0x3e0] sm:$0xff]
  %v140 = vld [vmem:[%s1 + $0x3e8] sm:$0xff]
  %v141 = vld [vmem:[%s1 + $0x3f0] sm:$0xff]
  %v142 = vld [vmem:[%s1 + $0x3f8] sm:$0xff]
  %143 = vmatpush.msra.mxu0 %v75
  %144 = vmatpush.msra.mxu0 %v71
  %145 = vmatpush.msra.mxu0 %v67
  %146 = vmatpush.msra.mxu0 %v63
  %147 = vmatpush.msra.mxu0 %v59
  %148 = vmatpush.msra.mxu0 %v55
  %149 = vmatpush.msra.mxu0 %v51
  %150 = vmatpush.msra.mxu0 %v47
  %151 = vmatpush.msra.mxu0 %v43
  %152 = vmatpush.msra.mxu0 %v39
  %153 = vmatpush.msra.mxu0 %v35
  %154 = vmatpush.msra.mxu0 %v31
  %155 = vmatpush.msra.mxu0 %v27
  %156 = vmatpush.msra.mxu0 %v23
  %157 = vmatpush.msra.mxu0 %v19
  %158 = vmatpush.msra.mxu0 %v15
  %159 = vmatmul.f32.gmra.mxu0 %v11
  %v160 = vpop.f32.mrf.mxu0
  %v161 = vadd.f32 0.0, %v160
  %162 = vmatmul.f32.gmra.mxu0 %v13
  %v163 = vpop.f32.mrf.mxu0
  %v164 = vadd.f32 0.0, %v163
  %165 = vdwg.mxu0
  %166 = vmatpush.msra.mxu0 %v139
  %167 = vmatpush.msra.mxu0 %v135
  %168 = vmatpush.msra.mxu0 %v131
  %169 = vmatpush.msra.mxu0 %v127
  %170 = vmatpush.msra.mxu0 %v123
  %171 = vmatpush.msra.mxu0 %v119
  %172 = vmatpush.msra.mxu0 %v115
  %173 = vmatpush.msra.mxu0 %v111
  %174 = vmatpush.msra.mxu0 %v107
  %175 = vmatpush.msra.mxu0 %v103
  %176 = vmatpush.msra.mxu0 %v99
  %177 = vmatpush.msra.mxu0 %v95
  %178 = vmatpush.msra.mxu0 %v91
  %179 = vmatpush.msra.mxu0 %v87
  %180 = vmatpush.msra.mxu0 %v83
  %181 = vmatpush.msra.mxu0 %v79
  %182 = vmatmul.f32.gmra.mxu0 %v12
  %v183 = vpop.f32.mrf.mxu0
  %v184 = vadd.f32 %v161, %v183
  %185 = vmatmul.f32.gmra.mxu0 %v14
  %v186 = vpop.f32.mrf.mxu0
  %v187 = vadd.f32 %v164, %v186
  %188 = vdwg.mxu0
  %189 = vmatpush.msra.mxu0 %v76
  %190 = vmatpush.msra.mxu0 %v72
  %191 = vmatpush.msra.mxu0 %v68
  %192 = vmatpush.msra.mxu0 %v64
  %193 = vmatpush.msra.mxu0 %v60
  %194 = vmatpush.msra.mxu0 %v56
  %195 = vmatpush.msra.mxu0 %v52
  %196 = vmatpush.msra.mxu0 %v48
  %197 = vmatpush.msra.mxu0 %v44
  %198 = vmatpush.msra.mxu0 %v40
  %199 = vmatpush.msra.mxu0 %v36
  %200 = vmatpush.msra.mxu0 %v32
  %201 = vmatpush.msra.mxu0 %v28
  %202 = vmatpush.msra.mxu0 %v24
  %203 = vmatpush.msra.mxu0 %v20
  %204 = vmatpush.msra.mxu0 %v16
  %205 = vmatmul.f32.gmra.mxu0 %v11
  %v206 = vpop.f32.mrf.mxu0
  %v207 = vadd.f32 0.0, %v206
  %208 = vmatmul.f32.gmra.mxu0 %v13
  %v209 = vpop.f32.mrf.mxu0
  %v210 = vadd.f32 0.0, %v209
  %211 = vdwg.mxu0
  %212 = vmatpush.msra.mxu0 %v140
  %213 = vmatpush.msra.mxu0 %v136
  %214 = vmatpush.msra.mxu0 %v132
  %215 = vmatpush.msra.mxu0 %v128
  %216 = vmatpush.msra.mxu0 %v124
  %217 = vmatpush.msra.mxu0 %v120
  %218 = vmatpush.msra.mxu0 %v116
  %219 = vmatpush.msra.mxu0 %v112
  %220 = vmatpush.msra.mxu0 %v108
  %221 = vmatpush.msra.mxu0 %v104
  %222 = vmatpush.msra.mxu0 %v100
  %223 = vmatpush.msra.mxu0 %v96
  %224 = vmatpush.msra.mxu0 %v92
  %225 = vmatpush.msra.mxu0 %v88
  %226 = vmatpush.msra.mxu0 %v84
  %227 = vmatpush.msra.mxu0 %v80
  %228 = vmatmul.f32.gmra.mxu0 %v12
  %v229 = vpop.f32.mrf.mxu0
  %v230 = vadd.f32 %v207, %v229
  %231 = vmatmul.f32.gmra.mxu0 %v14
  %v232 = vpop.f32.mrf.mxu0
  %v233 = vadd.f32 %v210, %v232
  %234 = vdwg.mxu0
  %235 = vmatpush.msra.mxu0 %v77
  %236 = vmatpush.msra.mxu0 %v73
  %237 = vmatpush.msra.mxu0 %v69
  %238 = vmatpush.msra.mxu0 %v65
  %239 = vmatpush.msra.mxu0 %v61
  %240 = vmatpush.msra.mxu0 %v57
  %241 = vmatpush.msra.mxu0 %v53
  %242 = vmatpush.msra.mxu0 %v49
  %243 = vmatpush.msra.mxu0 %v45
  %244 = vmatpush.msra.mxu0 %v41
  %245 = vmatpush.msra.mxu0 %v37
  %246 = vmatpush.msra.mxu0 %v33
  %247 = vmatpush.msra.mxu0 %v29
  %248 = vmatpush.msra.mxu0 %v25
  %249 = vmatpush.msra.mxu0 %v21
  %250 = vmatpush.msra.mxu0 %v17
  %251 = vmatmul.f32.gmra.mxu0 %v11
  %v252 = vpop.f32.mrf.mxu0
  %v253 = vadd.f32 0.0, %v252
  %254 = vmatmul.f32.gmra.mxu0 %v13
  %v255 = vpop.f32.mrf.mxu0
  %v256 = vadd.f32 0.0, %v255
  %257 = vdwg.mxu0
  %258 = vmatpush.msra.mxu0 %v141
  %259 = vmatpush.msra.mxu0 %v137
  %260 = vmatpush.msra.mxu0 %v133
  %261 = vmatpush.msra.mxu0 %v129
  %262 = vmatpush.msra.mxu0 %v125
  %263 = vmatpush.msra.mxu0 %v121
  %264 = vmatpush.msra.mxu0 %v117
  %265 = vmatpush.msra.mxu0 %v113
  %266 = vmatpush.msra.mxu0 %v109
  %267 = vmatpush.msra.mxu0 %v105
  %268 = vmatpush.msra.mxu0 %v101
  %269 = vmatpush.msra.mxu0 %v97
  %270 = vmatpush.msra.mxu0 %v93
  %271 = vmatpush.msra.mxu0 %v89
  %272 = vmatpush.msra.mxu0 %v85
  %273 = vmatpush.msra.mxu0 %v81
  %274 = vmatmul.f32.gmra.mxu0 %v12
  %v275 = vpop.f32.mrf.mxu0
  %v276 = vadd.f32 %v253, %v275
  %277 = vmatmul.f32.gmra.mxu0 %v14
  %v278 = vpop.f32.mrf.mxu0
  %v279 = vadd.f32 %v256, %v278
  %280 = vdwg.mxu0
  %281 = vmatpush.msra.mxu0 %v78
  %282 = vmatpush.msra.mxu0 %v74
  %283 = vmatpush.msra.mxu0 %v70
  %284 = vmatpush.msra.mxu0 %v66
  %285 = vmatpush.msra.mxu0 %v62
  %286 = vmatpush.msra.mxu0 %v58
  %287 = vmatpush.msra.mxu0 %v54
  %288 = vmatpush.msra.mxu0 %v50
  %289 = vmatpush.msra.mxu0 %v46
  %290 = vmatpush.msra.mxu0 %v42
  %291 = vmatpush.msra.mxu0 %v38
  %292 = vmatpush.msra.mxu0 %v34
  %293 = vmatpush.msra.mxu0 %v30
  %294 = vmatpush.msra.mxu0 %v26
  %295 = vmatpush.msra.mxu0 %v22
  %296 = vmatpush.msra.mxu0 %v18
  %297 = vmatmul.f32.gmra.mxu0 %v11
  %v298 = vpop.f32.mrf.mxu0
  %v299 = vadd.f32 0.0, %v298
  %300 = vmatmul.f32.gmra.mxu0 %v13
  %v301 = vpop.f32.mrf.mxu0
  %v302 = vadd.f32 0.0, %v301
  %303 = vdwg.mxu0
  %304 = vmatpush.msra.mxu0 %v142
  %305 = vmatpush.msra.mxu0 %v138
  %306 = vmatpush.msra.mxu0 %v134
  %307 = vmatpush.msra.mxu0 %v130
  %308 = vmatpush.msra.mxu0 %v126
  %309 = vmatpush.msra.mxu0 %v122
  %310 = vmatpush.msra.mxu0 %v118
  %311 = vmatpush.msra.mxu0 %v114
  %312 = vmatpush.msra.mxu0 %v110
  %313 = vmatpush.msra.mxu0 %v106
  %314 = vmatpush.msra.mxu0 %v102
  %315 = vmatpush.msra.mxu0 %v98
  %316 = vmatpush.msra.mxu0 %v94
  %317 = vmatpush.msra.mxu0 %v90
  %318 = vmatpush.msra.mxu0 %v86
  %319 = vmatpush.msra.mxu0 %v82
  %320 = vmatmul.f32.gmra.mxu0 %v12
  %v321 = vpop.f32.mrf.mxu0
  %v322 = vadd.f32 %v299, %v321
  %323 = vmatmul.f32.gmra.mxu0 %v14
  %v324 = vpop.f32.mrf.mxu0
  %v325 = vadd.f32 %v302, %v324
  %326 = vdwg.mxu0
  %v327 = vmax.f32 %v184, 0.0
  %v328 = vmax.f32 %v230, 0.0
  %v329 = vmax.f32 %v276, 0.0
  %v330 = vmax.f32 %v322, 0.0
  %v331 = vmax.f32 %v187, 0.0
  %v332 = vmax.f32 %v233, 0.0
  %v333 = vmax.f32 %v279, 0.0
  %v334 = vmax.f32 %v325, 0.0
  %335 = vst [vmem:[%s2] sm:$0xff] %v327
  %336 = vst [vmem:[%s2 + $0x8] sm:$0xff] %v328
  %337 = vst [vmem:[%s2 + $0x10] sm:$0xff] %v329
  %338 = vst [vmem:[%s2 + $0x18] sm:$0xff] %v330
  %339 = vst [vmem:[%s2 + $0x20] sm:$0xff] %v331
  %340 = vst [vmem:[%s2 + $0x28] sm:$0xff] %v332
  %341 = vst [vmem:[%s2 + $0x30] sm:$0xff] %v333
  %342 = vst [vmem:[%s2 + $0x38] sm:$0xff] %v334
  // Predicated region
  $region10: #{mixconv_block_forward.1} parent=0 // pred_check
    _
  $region11: #{mixconv_block_forward.1} parent=0 // pred_check_branch
    %344 = sbr.rel (0) target = $region13
  $region12: #{mixconv_block_forward.1} parent=0 // pred_region
    _
  $region13: #{mixconv_block_forward.1} parent=0 // pred_fallthru
    _
  // Predicated region
  $region14: #{mixconv_block_forward.1} parent=0 // pred_check
    _
  $region15: #{mixconv_block_forward.1} parent=0 // pred_check_branch
    %346 = sbr.rel (0) target = $region17
  $region16: #{mixconv_block_forward.1} parent=0 // pred_region
    _
  $region17: #{mixconv_block_forward.1} parent=0 // pred_fallthru
    _

</llo_original>
